<compile_context>
chip_gen: v5e
topology: v5e:2x2
jax: 0.10.0
libtpu: 0.0.40
codegen_flags: <defaults>
</compile_context>

<pallas_src>
import functools

import jax
import jax.numpy as jnp
from jax.experimental import pallas as pl
from jax.experimental.pallas import tpu as pltpu

_LANE = 128
_VMEM_LIMIT_FLOOR = 32 * 1024 * 1024   # >= every chip's default scoped VMEM


def _sublane_multiple(dtype):
    """Sublane packing multiple: 8 for 4-byte, 16 for 2-byte, 32 for 1-byte."""
    return max(8, 32 // max(1, jnp.dtype(dtype).itemsize))


def _default_num_slices():
    """2 on multi-TensorCore ('megacore') chips, else 1 (best-effort detect)."""
    try:
        kind = jax.devices()[0].device_kind.lower()
    except Exception:
        return 1
    # v4 / v5p / v7x expose 2 TensorCores per device; v5e / v6e expose 1.
    if any(tag in kind for tag in ("v4", "v5p", "7x", "v7")):
        return 2
    return 1


def _pow_abs(diff, p):
    if p == 1:
        return jnp.abs(diff)
    if p == 2:
        return diff * diff
    return jnp.abs(diff) ** p


def _tail_mask(shape, rem):
    """Mask (block-local element index < rem) for the last real block.

    `rem` is a static Python int <= block_rows*128, so when it is a multiple
    of 128 a single sublane-iota compare suffices (no lane iota / mul / add).
    """
    if rem % _LANE == 0:
        return jax.lax.broadcasted_iota(jnp.int32, shape, 0) < (rem // _LANE)
    return (jax.lax.broadcasted_iota(jnp.int32, shape, 0) * _LANE
            + jax.lax.broadcasted_iota(jnp.int32, shape, 1)) < rem


# ---------------------------------------------------------------------------
# Main path: sum(|a - b| ** p) over a (rows, 128)-flattened view.
# ---------------------------------------------------------------------------
def _absdiff_pow_sum_kernel(a_ref, b_ref, o_ref, acc_ref, *, p,
                            steps_per_slice, total_blocks, tail_rem,
                            mask_tail, has_redundant):
    i = pl.program_id(1)

    @pl.when(i == 0)
    def _():
        acc_ref[...] = jnp.zeros_like(acc_ref)

    gblk = pl.program_id(0) * steps_per_slice + i
    last = total_blocks - 1

    def tile_pow():
        diff = a_ref[...].astype(jnp.float32) - b_ref[...].astype(jnp.float32)
        return _pow_abs(diff, p)

    def accumulate(d):
        # (br,128) -> (br//8, 8, 128) matches vreg tiling; axis-0 sum is
        # plain VPU adds into the vreg-shaped (8,128) accumulator.
        acc_ref[...] += d.reshape(-1, 8, _LANE).sum(axis=0)

    if mask_tail:
        # Only the statically-known last real block pays the mask; redundant
        # clamped blocks (gblk > last) are skipped entirely.
        @pl.when(gblk < last)
        def _():
            accumulate(tile_pow())

        @pl.when(gblk == last)
        def _():
            d = tile_pow()
            accumulate(jnp.where(_tail_mask(d.shape, tail_rem), d, 0.0))
    elif has_redundant:
        @pl.when(gblk <= last)
        def _():
            accumulate(tile_pow())
    else:
        accumulate(tile_pow())

    @pl.when(i == pl.num_programs(1) - 1)
    def _():
        o_ref[...] = acc_ref[...]


def _sum_absdiff_pow(canvas, gt, p, tile_bytes, num_slices):
    """Returns (sum(|canvas - gt|**p), element_count)."""
    n = canvas.size
    dtype = canvas.dtype
    sub = _sublane_multiple(dtype)
    itemsize = jnp.dtype(dtype).itemsize

    rows = pl.cdiv(n, _LANE)
    rows = pl.cdiv(rows, sub) * sub          # sublane-aligned row count
    padded = rows * _LANE

    a = canvas.reshape(-1)
    b = gt.reshape(-1)
    if padded != n:
        # Minimal zero pad so the (rows,128) view is legal; padded / ragged
        # elements are masked (last block only) in the kernel.
        a = jnp.pad(a, (0, padded - n))
        b = jnp.pad(b, (0, padded - n))
    a2 = a.reshape(rows, _LANE)
    b2 = b.reshape(rows, _LANE)

    # Rows per block: ~tile_bytes per input, rounded to the dtype's sublane
    # multiple (or full extent for small inputs).
    br_target = max(sub, (tile_bytes // (_LANE * itemsize)) // sub * sub)
    br = min(br_target, rows)

    total_blocks = pl.cdiv(rows, br)
    g = max(1, min(num_slices, total_blocks))   # TC slices (v7x/v4/v5p: 2)
    steps = pl.cdiv(total_blocks, g)

    block_elems = br * _LANE
    tail_rem = n - (total_blocks - 1) * block_elems   # valid elems, last block
    mask_tail = tail_rem != block_elems
    has_redundant = g * steps != total_blocks

    def in_map(c, i):
        # Clamp: redundant trailing steps re-read the last block (they are
        # skipped in-kernel) instead of issuing an out-of-bounds DMA.
        return (jnp.minimum(c * steps + i, total_blocks - 1), 0)

    vmem_limit = int(max(_VMEM_LIMIT_FLOOR,
                         4 * br * _LANE * itemsize + (2 << 20)))

    partials = pl.pallas_call(
        functools.partial(_absdiff_pow_sum_kernel, p=p,
                          steps_per_slice=steps, total_blocks=total_blocks,
                          tail_rem=tail_rem, mask_tail=mask_tail,
                          has_redundant=has_redundant),
        out_shape=jax.ShapeDtypeStruct((g * 8, _LANE), jnp.float32),
        grid=(g, steps),
        in_specs=[pl.BlockSpec((br, _LANE), in_map),
                  pl.BlockSpec((br, _LANE), in_map)],
        out_specs=pl.BlockSpec((8, _LANE), lambda c, i: (c, 0)),
        scratch_shapes=[pltpu.VMEM((8, _LANE), jnp.float32)],
        # "parallel" on the leading axis is the documented megacore split;
        # on single-TC chips g defaults to 1 so it is a no-op loop.
        compiler_params=pltpu.CompilerParams(
            dimension_semantics=("parallel", "arbitrary"),
            vmem_limit_bytes=vmem_limit),
    )(a2, b2)

    return jnp.sum(partials), n


# ---------------------------------------------------------------------------
# ignore_color path: sum(|mean_c(a) - mean_c(b)| ** p), fused in-kernel.
# ---------------------------------------------------------------------------
def _chanmean_absdiff_pow_sum_kernel(a_ref, b_ref, o_ref, acc_ref, *, p,
                                     inv_c, steps_per_slice, total_blocks,
                                     n_hw_blocks, tail_rem, mask_tail,
                                     has_redundant):
    i = pl.program_id(1)

    @pl.when(i == 0)
    def _():
        acc_ref[...] = jnp.zeros_like(acc_ref)

    gblk = pl.program_id(0) * steps_per_slice + i

    def tile_pow():
        # mean_c(a) - mean_c(b) == mean_c(a - b): diff first, reduce once.
        # C is a leading (non-sublane) axis of (C, t_rows, 128), so the
        # reduction is dense VPU adds over full vregs (no XLU).
        diff = a_ref[0].astype(jnp.float32) - b_ref[0].astype(jnp.float32)
        m = diff.sum(axis=0) * inv_c          # (t_rows, 128)
        return _pow_abs(m, p)

    def accumulate(d):
        acc_ref[...] += d.reshape(-1, 8, _LANE).sum(axis=0)

    if mask_tail:
        in_range = gblk < total_blocks
        is_tail = (gblk % n_hw_blocks) == (n_hw_blocks - 1)

        @pl.when(jnp.logical_and(in_range, jnp.logical_not(is_tail)))
        def _():
            accumulate(tile_pow())

        @pl.when(jnp.logical_and(in_range, is_tail))
        def _():
            d = tile_pow()
            accumulate(jnp.where(_tail_mask(d.shape, tail_rem), d, 0.0))
    elif has_redundant:
        @pl.when(gblk < total_blocks)
        def _():
            accumulate(tile_pow())
    else:
        accumulate(tile_pow())

    @pl.when(i == pl.num_programs(1) - 1)
    def _():
        o_ref[...] = acc_ref[...]


def _sum_chanmean_absdiff_pow(canvas, gt, p, tile_bytes, num_slices):
    """Returns (sum(|mean_c(canvas) - mean_c(gt)|**p), element_count)."""
    bsz, ch = canvas.shape[0], canvas.shape[1]
    hw = 1
    for s in canvas.shape[2:]:
        hw *= s

    dtype = canvas.dtype
    sub = _sublane_multiple(dtype)
    itemsize = jnp.dtype(dtype).itemsize

    hw_rows = pl.cdiv(hw, _LANE)
    hw_rows = pl.cdiv(hw_rows, sub) * sub
    padded_hw = hw_rows * _LANE

    a3 = canvas.reshape(bsz, ch, hw)
    b3 = gt.reshape(bsz, ch, hw)
    if padded_hw != hw:
        pad = ((0, 0), (0, 0), (0, padded_hw - hw))
        a3 = jnp.pad(a3, pad)
        b3 = jnp.pad(b3, pad)
    a4 = a3.reshape(bsz, ch, hw_rows, _LANE)
    b4 = b3.reshape(bsz, ch, hw_rows, _LANE)

    t_target = max(sub, (tile_bytes // (ch * _LANE * itemsize)) // sub * sub)
    t_rows = min(t_target, hw_rows)

    n_hw_blocks = pl.cdiv(hw_rows, t_rows)
    total_blocks = bsz * n_hw_blocks
    g = max(1, min(num_slices, total_blocks))
    steps = pl.cdiv(total_blocks, g)

    block_elems = t_rows * _LANE
    tail_rem = hw - (n_hw_blocks - 1) * block_elems   # valid hw elems, tail blk
    mask_tail = tail_rem != block_elems
    has_redundant = g * steps != total_blocks

    def in_map(c, i):
        blk = jnp.minimum(c * steps + i, total_blocks - 1)
        return (blk // n_hw_blocks, 0, blk % n_hw_blocks, 0)

    vmem_limit = int(max(_VMEM_LIMIT_FLOOR,
                         4 * ch * t_rows * _LANE * itemsize + (2 << 20)))

    partials = pl.pallas_call(
        functools.partial(_chanmean_absdiff_pow_sum_kernel, p=p,
                          inv_c=1.0 / ch, steps_per_slice=steps,
                          total_blocks=total_blocks, n_hw_blocks=n_hw_blocks,
                          tail_rem=tail_rem, mask_tail=mask_tail,
                          has_redundant=has_redundant),
        out_shape=jax.ShapeDtypeStruct((g * 8, _LANE), jnp.float32),
        grid=(g, steps),
        in_specs=[pl.BlockSpec((1, ch, t_rows, _LANE), in_map),
                  pl.BlockSpec((1, ch, t_rows, _LANE), in_map)],
        out_specs=pl.BlockSpec((8, _LANE), lambda c, i: (c, 0)),
        scratch_shapes=[pltpu.VMEM((8, _LANE), jnp.float32)],
        compiler_params=pltpu.CompilerParams(
            dimension_semantics=("parallel", "arbitrary"),
            vmem_limit_bytes=vmem_limit),
    )(a4, b4)

    return jnp.sum(partials), bsz * hw


def pixel_loss(canvas, gt, p=1, ignore_color=False,
               tile_bytes=4 << 20, num_slices=None):
    """JAX/Pallas equivalent of PixelLoss(p).forward(canvas, gt, ignore_color)."""
    if canvas.shape != gt.shape:
        raise ValueError(f"shape mismatch: {canvas.shape} vs {gt.shape}")
    if num_slices is None:
        num_slices = _default_num_slices()
    if ignore_color:
        total, count = _sum_chanmean_absdiff_pow(canvas, gt, p, tile_bytes,
                                                 num_slices)
    else:
        total, count = _sum_absdiff_pow(canvas, gt, p, tile_bytes, num_slices)
    return total / jnp.float32(count)


if __name__ == "__main__":
    key = jax.random.PRNGKey(0)
    k1, k2, k3, k4, k5, k6 = jax.random.split(key, 6)

    # --- NCHW images, module-consistent small shapes ---
    canvas = jax.random.normal(k1, (2, 4, 16, 16), dtype=jnp.float32)
    gt = jax.random.normal(k2, (2, 4, 16, 16), dtype=jnp.float32)

    # p = 1 (module default)
    loss = jax.block_until_ready(pixel_loss(canvas, gt, p=1))
    ref = jnp.mean(jnp.abs(canvas - gt))
    assert jnp.allclose(loss, ref, rtol=1e-5, atol=1e-6), (loss, ref)

    # p = 2
    loss2 = jax.block_until_ready(pixel_loss(canvas, gt, p=2))
    ref2 = jnp.mean(jnp.abs(canvas - gt) ** 2)
    assert jnp.allclose(loss2, ref2, rtol=1e-5, atol=1e-6), (loss2, ref2)

    # ignore_color = True (fused channel-mean kernel)
    loss_ic = jax.block_until_ready(pixel_loss(canvas, gt, p=1, ignore_color=True))
    ref_ic = jnp.mean(jnp.abs(jnp.mean(canvas, axis=1) - jnp.mean(gt, axis=1)))
    assert jnp.allclose(loss_ic, ref_ic, rtol=1e-5, atol=1e-6), (loss_ic, ref_ic)

    # Non-128-divisible shape: exercises padding + last-block element mask.
    c2 = jax.random.normal(k3, (2, 3, 15, 15), dtype=jnp.float32)
    g2 = jax.random.normal(k4, (2, 3, 15, 15), dtype=jnp.float32)
    loss_m = jax.block_until_ready(pixel_loss(c2, g2, p=1))
    ref_m = jnp.mean(jnp.abs(c2 - g2))
    assert jnp.allclose(loss_m, ref_m, rtol=1e-5, atol=1e-6), (loss_m, ref_m)

    loss_m_ic = jax.block_until_ready(pixel_loss(c2, g2, p=1, ignore_color=True))
    ref_m_ic = jnp.mean(jnp.abs(jnp.mean(c2, axis=1) - jnp.mean(g2, axis=1)))
    assert jnp.allclose(loss_m_ic, ref_m_ic, rtol=1e-5, atol=1e-6), (loss_m_ic, ref_m_ic)

    # Tiny forced tiles + 2 slices: exercises multi-block grid, the 2-slice
    # split, redundant-block skipping and the masked tail block (f32, sub=8).
    c3 = jax.random.normal(k5, (2, 3, 33, 33), dtype=jnp.float32)
    g3 = jax.random.normal(k6, (2, 3, 33, 33), dtype=jnp.float32)
    loss_s = jax.block_until_ready(
        pixel_loss(c3, g3, p=1, tile_bytes=8 * 128 * 4, num_slices=2))
    ref_s = jnp.mean(jnp.abs(c3 - g3))
    assert jnp.allclose(loss_s, ref_s, rtol=1e-5, atol=1e-6), (loss_s, ref_s)

    loss_s_ic = jax.block_until_ready(
        pixel_loss(c3, g3, p=1, ignore_color=True,
                   tile_bytes=3 * 8 * 128 * 4, num_slices=2))
    ref_s_ic = jnp.mean(jnp.abs(jnp.mean(c3, axis=1) - jnp.mean(g3, axis=1)))
    assert jnp.allclose(loss_s_ic, ref_s_ic, rtol=1e-5, atol=1e-6), (loss_s_ic, ref_s_ic)

    # bf16 inputs: exercises the 16-row sublane rounding, multi-block grid,
    # slice split and the row-only tail mask.
    cb = jax.random.normal(k5, (2, 4, 24, 24), dtype=jnp.bfloat16)
    gb = jax.random.normal(k6, (2, 4, 24, 24), dtype=jnp.bfloat16)
    loss_b = jax.block_until_ready(
        pixel_loss(cb, gb, p=1, tile_bytes=16 * 128 * 2, num_slices=2))
    ref_b = jnp.mean(jnp.abs(cb.astype(jnp.float32) - gb.astype(jnp.float32)))
    assert jnp.allclose(loss_b, ref_b, rtol=1e-3, atol=1e-5), (loss_b, ref_b)

    print("KERNEL_OK")
</pallas_src>

<mosaic_0001>
module attributes {stable_mosaic.version = 11 : i64} {
  func.func @_absdiff_pow_sum_kernel(%arg0: i32, %arg1: i32, %arg2: memref<16x128xf32, #tpu.memory_space<vmem>>, %arg3: memref<16x128xf32, #tpu.memory_space<vmem>>, %arg4: memref<8x128xf32, #tpu.memory_space<vmem>>, %arg5: memref<8x128xf32, #tpu.memory_space<vmem>>) attributes {dimension_semantics = [#tpu.dimension_semantics<parallel>, #tpu.dimension_semantics<arbitrary>], iteration_bounds = array<i64: 1, 1>, scalar_prefetch = 0 : i64, scratch_operands = 1 : i64, tpu.core_type = #tpu.core_type<tc>, window_params = [{transform_indices = @transform_0, window_bounds = array<i64: 16, 128>}, {transform_indices = @transform_1, window_bounds = array<i64: 16, 128>}, {transform_indices = @transform_2, window_bounds = array<i64: 8, 128>}]} {
    %c0_i32 = arith.constant 0 : i32
    %0 = arith.cmpi eq, %arg1, %c0_i32 : i32
    %1 = arith.extui %0 : i1 to i32
    %c0_i32_0 = arith.constant 0 : i32
    %2 = arith.cmpi ne, %1, %c0_i32_0 : i32
    scf.if %2 {
      %cst_10 = arith.constant 0.000000e+00 : f32
      %15 = vector.broadcast %cst_10 : f32 to vector<8x128xf32>
      %c0_11 = arith.constant 0 : index
      %c0_12 = arith.constant 0 : index
      %16 = vector.load %arg5[%c0_11, %c0_12] : memref<8x128xf32, #tpu.memory_space<vmem>>, vector<8x128xf32>
      tpu.vector_store %arg5[%c0_11, %c0_12], %15 {strides = array<i32>} : memref<8x128xf32, #tpu.memory_space<vmem>>, vector<8x128xf32>,
    } else {
    }
    %c0 = arith.constant 0 : index
    %c0_1 = arith.constant 0 : index
    %3 = vector.load %arg2[%c0, %c0_1] : memref<16x128xf32, #tpu.memory_space<vmem>>, vector<16x128xf32>
    %c0_2 = arith.constant 0 : index
    %c0_3 = arith.constant 0 : index
    %4 = vector.load %arg3[%c0_2, %c0_3] : memref<16x128xf32, #tpu.memory_space<vmem>>, vector<16x128xf32>
    %5 = arith.subf %3, %4 : vector<16x128xf32>
    %6 = math.absf %5 : vector<16x128xf32>
    %c0_4 = arith.constant 0 : index
    %c0_5 = arith.constant 0 : index
    %7 = vector.load %arg5[%c0_4, %c0_5] : memref<8x128xf32, #tpu.memory_space<vmem>>, vector<8x128xf32>
    %8 = vector.shape_cast %6 : vector<16x128xf32> to vector<2x8x128xf32>
    %cst = arith.constant dense<0.000000e+00> : vector<8x128xf32>
    %9 = vector.multi_reduction <add>, %8, %cst [0] : vector<2x8x128xf32> to vector<8x128xf32>
    %10 = arith.addf %7, %9 : vector<8x128xf32>
    %c0_6 = arith.constant 0 : index
    %c0_7 = arith.constant 0 : index
    %11 = vector.load %arg5[%c0_6, %c0_7] : memref<8x128xf32, #tpu.memory_space<vmem>>, vector<8x128xf32>
    tpu.vector_store %arg5[%c0_6, %c0_7], %10 {strides = array<i32>} : memref<8x128xf32, #tpu.memory_space<vmem>>, vector<8x128xf32>,
    %c0_i32_8 = arith.constant 0 : i32
    %12 = arith.cmpi eq, %arg1, %c0_i32_8 : i32
    %13 = arith.extui %12 : i1 to i32
    %c0_i32_9 = arith.constant 0 : i32
    %14 = arith.cmpi ne, %13, %c0_i32_9 : i32
    scf.if %14 {
      %c0_10 = arith.constant 0 : index
      %c0_11 = arith.constant 0 : index
      %15 = vector.load %arg5[%c0_10, %c0_11] : memref<8x128xf32, #tpu.memory_space<vmem>>, vector<8x128xf32>
      %c0_12 = arith.constant 0 : index
      %c0_13 = arith.constant 0 : index
      %16 = vector.load %arg4[%c0_12, %c0_13] : memref<8x128xf32, #tpu.memory_space<vmem>>, vector<8x128xf32>
      tpu.vector_store %arg4[%c0_12, %c0_13], %15 {strides = array<i32>} : memref<8x128xf32, #tpu.memory_space<vmem>>, vector<8x128xf32>,
    } else {
    }
    return
  }
  func.func @transform_0(%arg0: i32, %arg1: i32) -> (i32, i32) {
    %c1_i32 = arith.constant 1 : i32
    %0 = arith.muli %arg0, %c1_i32 : i32
    %1 = arith.addi %0, %arg1 : i32
    %c0_i32 = arith.constant 0 : i32
    %2 = arith.minsi %1, %c0_i32 : i32
    %c0_i32_0 = arith.constant 0 : i32
    %c0_i32_1 = arith.constant 0 : i32
    return %2, %c0_i32_0 : i32, i32
  }
  func.func @transform_1(%arg0: i32, %arg1: i32) -> (i32, i32) {
    %c1_i32 = arith.constant 1 : i32
    %0 = arith.muli %arg0, %c1_i32 : i32
    %1 = arith.addi %0, %arg1 : i32
    %c0_i32 = arith.constant 0 : i32
    %2 = arith.minsi %1, %c0_i32 : i32
    %c0_i32_0 = arith.constant 0 : i32
    %c0_i32_1 = arith.constant 0 : i32
    return %2, %c0_i32_0 : i32, i32
  }
  func.func @transform_2(%arg0: i32, %arg1: i32) -> (i32, i32) {
    %c0_i32 = arith.constant 0 : i32
    %c0_i32_0 = arith.constant 0 : i32
    return %arg0, %c0_i32 : i32, i32
  }
}

</mosaic_0001>

<llo_original>
// kernel: tpu_custom_call.1
$region0: #{tpu_custom_call.1}
  #allocation0 [shape = 'u32[]', space=smem, size = 0x4, offset = 0x4, fixed_abs, tag = 'smem constant byte address 0x4 - core index']
  #allocation1 [shape = 'u32[72,128]{1,0:T(1,128)}', space=vmem, size = 0x9000, scoped, tag = 'internal scratch']
  #allocation2 [shape = 'f32[8,128]{1,0:T(8,128)}', space=vmem, size = 0x1000, scoped, tag = 'scratch operand']
  %s0 = inlined_call_operand.hbm [shape: f32[16,128], index: 0, kind: input, shape index: {}]
  %s1 = inlined_call_operand.hbm [shape: f32[16,128], index: 1, kind: input, shape index: {}]
  %s2 = inlined_call_operand.hbm [shape: f32[8,128], index: 2, kind: output, shape index: {}]
  %s3 = sld [smem:[#allocation0]]
  $region34: #{tpu_custom_call.1} parent=0
    _
  %s5 = ssub.s32 1, %s3
  %s6 = scalar_select 0, %s5, %s3
  $region1: #{tpu_custom_call.1} parent=0
    #allocation3 [shape = 'u8[8192]{0}', space=vmem, size = 0x2000, scoped, tag = 'input window, operand 0, single buffered']
    #allocation4 [shape = 's32[1]{0}', space=sflag, size = 0x4, scoped, tag = 'scoped memory for tpu_custom_call.1']
    #allocation5 [shape = 's32[1]{0}', space=sflag, size = 0x4, scoped, tag = 'scoped memory for tpu_custom_call.1']
    #allocation6 [shape = 'u8[8192]{0}', space=vmem, size = 0x2000, scoped, tag = 'input window, operand 1, single buffered']
    #allocation7 [shape = 's32[1]{0}', space=sflag, size = 0x4, scoped, tag = 'scoped memory for tpu_custom_call.1']
    #allocation8 [shape = 'u8[4096]{0}', space=vmem, size = 0x1000, scoped, tag = 'output window, operand 0, single buffered']
    %7 = vsyncpa [#allocation4], 0
    %8 = vsyncpa [#allocation7], 0
    %9 = vsyncpa [#allocation5], 0
    // Predicated region
    $region2: #{tpu_custom_call.1} parent=1 // pred_check
      _
    $region3: #{tpu_custom_call.1} parent=1 // pred_check_branch
      %11 = sbr.rel (0) target = $region5
    $region4: #{tpu_custom_call.1} parent=1 // pred_region
      %s12 = sadd.s32 0, 0
      %p13 = scmp.lt.s32.totalorder %s12, 0
      %s14 = scalar_select %p13, %s12, 0
      %s15 = smul.u32 2, %s14
      %17 = vsyncadd [#allocation4], 0
      %s18 = smul.addr %s15, 8
      %s19 = scalar_lea.hbm %s0, %s18
      %s20 = sshll.u32 %s19, 4
      %s21 = int_to_ptr.hbm [resolvable:$true] %s20
      %s22 = sshll.u32 [#allocation3], 4
      %s23 = int_to_ptr.vmem [resolvable:$true] %s22
      %28 = dma.hbm_to_vmem [thread:$0]  %s21, 256, %s23, [#allocation4], 128, 128, 8
    $region5: #{tpu_custom_call.1} parent=1 // pred_fallthru
      _
    // Predicated region
    $region6: #{tpu_custom_call.1} parent=1 // pred_check
      _
    $region7: #{tpu_custom_call.1} parent=1 // pred_check_branch
      %30 = sbr.rel (0) target = $region9
    $region8: #{tpu_custom_call.1} parent=1 // pred_region
      %s31 = sadd.s32 0, 0
      %p32 = scmp.lt.s32.totalorder %s31, 0
      %s33 = scalar_select %p32, %s31, 0
      %s34 = smul.u32 2, %s33
      %36 = vsyncadd [#allocation7], 0
      %s37 = smul.addr %s34, 8
      %s38 = scalar_lea.hbm %s1, %s37
      %s39 = sshll.u32 %s38, 4
      %s40 = int_to_ptr.hbm [resolvable:$true] %s39
      %s41 = sshll.u32 [#allocation6], 4
      %s42 = int_to_ptr.vmem [resolvable:$true] %s41
      %47 = dma.hbm_to_vmem [thread:$0]  %s40, 256, %s42, [#allocation7], 128, 128, 8
    $region9: #{tpu_custom_call.1} parent=1 // pred_fallthru
      _
    // Predicated region
    $region10: #{tpu_custom_call.1} parent=1 // pred_check
      _
    $region11: #{tpu_custom_call.1} parent=1 // pred_check_branch
      %49 = sbr.rel (0) target = $region13
    $region12: #{tpu_custom_call.1} parent=1 // pred_region
      %51 = dma.done [#allocation4], 256
    $region13: #{tpu_custom_call.1} parent=1 // pred_fallthru
      _
    // Predicated region
    $region14: #{tpu_custom_call.1} parent=1 // pred_check
      _
    $region15: #{tpu_custom_call.1} parent=1 // pred_check_branch
      %53 = sbr.rel (0) target = $region17
    $region16: #{tpu_custom_call.1} parent=1 // pred_region
      %55 = dma.done [#allocation7], 256
    $region17: #{tpu_custom_call.1} parent=1 // pred_fallthru
      _
    %s56 = sadd.s32 0, 0
    %p57 = scmp.lt.s32.totalorder %s56, 0
    %s58 = scalar_select %p57, %s56, 0
    %s59 = smul.u32 2, %s58
    %s60 = sadd.s32 0, 0
    %p61 = scmp.lt.s32.totalorder %s60, 0
    %s62 = scalar_select %p61, %s60, 0
    %s63 = smul.u32 2, %s62
    %p64 = scmp.eq.s32.totalorder 0, 0
    // Predicated region
    $region18: #{tpu_custom_call.1} parent=1 // pred_check
      %p65 = pneg %p64
    $region19: #{tpu_custom_call.1} parent=1 // pred_check_branch
      %67 = sbr.rel (%p65) target = $region21
    $region20: #{tpu_custom_call.1} parent=1 // pred_region
      %68 = vst [vmem:[#allocation2] sm:$0xff] 0.0
    $region21: #{tpu_custom_call.1} parent=1 // pred_fallthru
      _
    %v69 = vld [vmem:[#allocation3] sm:$0xff]
    %v70 = vld [vmem:[#allocation3 + $0x8] sm:$0xff]
    %v71 = vld [vmem:[#allocation6] sm:$0xff]
    %v72 = vld [vmem:[#allocation6 + $0x8] sm:$0xff]
    %v73 = vsub.f32 %v69, %v71
    %v74 = vsub.f32 %v70, %v72
    %v75 = vand.u32 2147483647, %v73
    %v76 = vand.u32 2147483647, %v74
    %v77 = vld [vmem:[#allocation2] sm:$0xff]
    %v78 = vadd.f32 %v75, %v76
    %v79 = vadd.f32 %v77, %v78
    %80 = vst [vmem:[#allocation2] sm:$0xff] %v79
    // Predicated region
    $region22: #{tpu_custom_call.1} parent=1 // pred_check
      %p81 = pneg %p64
    $region23: #{tpu_custom_call.1} parent=1 // pred_check_branch
      %83 = sbr.rel (%p81) target = $region25
    $region24: #{tpu_custom_call.1} parent=1 // pred_region
      %v84 = vld [vmem:[#allocation2] sm:$0xff]
      %85 = vst [vmem:[#allocation8] sm:$0xff] %v84
    $region25: #{tpu_custom_call.1} parent=1 // pred_fallthru
      _
    // Predicated region
    $region26: #{tpu_custom_call.1} parent=1 // pred_check
      _
    $region27: #{tpu_custom_call.1} parent=1 // pred_check_branch
      %87 = sbr.rel (0) target = $region29
    $region28: #{tpu_custom_call.1} parent=1 // pred_region
      %89 = vsyncadd [#allocation5], 0
      %s91 = sshll.u32 [#allocation8], 4
      %s92 = int_to_ptr.vmem [resolvable:$true] %s91
      %s93 = sshll.u32 %s2, 4
      %s94 = int_to_ptr.hbm [resolvable:$true] %s93
      %96 = dma.vmem_to_hbm [thread:$0]  %s92, 128, %s94, [#allocation5]
    $region29: #{tpu_custom_call.1} parent=1 // pred_fallthru
      _
    // Predicated region
    $region30: #{tpu_custom_call.1} parent=1 // pred_check
      _
    $region31: #{tpu_custom_call.1} parent=1 // pred_check_branch
      %98 = sbr.rel (0) target = $region33
    $region32: #{tpu_custom_call.1} parent=1 // pred_region
      %100 = dma.done [#allocation5], 128
    $region33: #{tpu_custom_call.1} parent=1 // pred_fallthru
      _
    %101 = vsyncpa [#allocation4], 1
    %102 = vsyncpa [#allocation7], 1
    %103 = vsyncpa [#allocation5], 1

</llo_original>
